<compile_context>
chip_gen: v5e
topology: v5e:2x2
jax: 0.10.0
libtpu: 0.0.40
codegen_flags: <defaults>
</compile_context>

<pallas_src>
import functools

import jax
import jax.numpy as jnp
from jax.experimental import pallas as pl
from jax.experimental.pallas import tpu as pltpu


def _round_up(x, m):
    return (x + m - 1) // m * m


# Scoped VMEM budget: well under v7x's 64 MiB physical VMEM, generous on
# v5e/v6e (128 MiB physical). Per-step footprints below stay far smaller.
_VMEM_LIMIT = 32 * 1024 * 1024


# --------------------------------------------------------------------------
# Kernel 1 (tiled path): feature pre-transform   xw = x @ W    (row-tiled)
# --------------------------------------------------------------------------
def transform_kernel(x_ref, w_ref, xw_ref):
    xw_ref[...] = jnp.dot(
        x_ref[...], w_ref[...], preferred_element_type=jnp.float32
    ).astype(xw_ref.dtype)


def _transform(x, w, *, tm):
    n_pad, f_pad = x.shape
    h_pad = w.shape[1]
    return pl.pallas_call(
        transform_kernel,
        out_shape=jax.ShapeDtypeStruct((n_pad, h_pad), jnp.bfloat16),
        grid=(n_pad // tm,),
        in_specs=[
            pl.BlockSpec((tm, f_pad), lambda i: (i, 0)),
            pl.BlockSpec((f_pad, h_pad), lambda i: (0, 0)),
        ],
        out_specs=pl.BlockSpec((tm, h_pad), lambda i: (i, 0)),
        compiler_params=pltpu.CompilerParams(
            dimension_semantics=("parallel",),
            vmem_limit_bytes=_VMEM_LIMIT,
        ),
        cost_estimate=pl.CostEstimate(
            flops=2 * n_pad * f_pad * h_pad,
            transcendentals=0,
            bytes_accessed=2 * (n_pad * f_pad + f_pad * h_pad + n_pad * h_pad),
        ),
    )(x, w)


# --------------------------------------------------------------------------
# Kernel 2 (tiled path): one GIN layer.
#   acc  = A_hat[i, :] @ XW          (A_hat int8 -> bf16 in-kernel; XW resident)
#   h[i] = BN( relu( relu(acc + b1) @ W2 + b2 ) )
# Packed-params rows: 0=b1, 1=b2, 2=BN scale, 3=BN shift.
# --------------------------------------------------------------------------
def gin_layer_kernel(a_ref, xw_ref, w2_ref, bp_ref, h_ref, acc_ref, *, tk):
    k = pl.program_id(1)

    @pl.when(k == 0)
    def _():
        acc_ref[...] = jnp.zeros_like(acc_ref)

    ks = pl.multiple_of(k * tk, tk)
    acc_ref[...] += jnp.dot(
        a_ref[...].astype(jnp.bfloat16),        # int8 HBM tile -> bf16 on VPU
        xw_ref[pl.ds(ks, tk), :],               # VMEM-resident XW slice
        preferred_element_type=jnp.float32,
    )

    @pl.when(k == pl.num_programs(1) - 1)
    def _():
        z = jnp.maximum(acc_ref[...] + bp_ref[0:1, :], 0.0)      # ReLU inside nn
        z = jnp.dot(z.astype(w2_ref.dtype), w2_ref[...],
                    preferred_element_type=jnp.float32) + bp_ref[1:2, :]
        z = jnp.maximum(z, 0.0)                                   # F.relu(conv(.))
        h_ref[...] = (z * bp_ref[2:3, :] + bp_ref[3:4, :]).astype(h_ref.dtype)


def _gin_layer(a_hat, xw, w2, bp, *, tm, tk):
    n_pad = a_hat.shape[0]
    h_pad = xw.shape[1]
    kernel = functools.partial(gin_layer_kernel, tk=tk)
    return pl.pallas_call(
        kernel,
        out_shape=jax.ShapeDtypeStruct((n_pad, h_pad), jnp.bfloat16),
        grid=(n_pad // tm, n_pad // tk),
        in_specs=[
            pl.BlockSpec((tm, tk), lambda i, k: (i, k)),        # A_hat tile (int8)
            pl.BlockSpec((n_pad, h_pad), lambda i, k: (0, 0)),  # XW, VMEM-resident
            pl.BlockSpec((h_pad, h_pad), lambda i, k: (0, 0)),  # W2
            pl.BlockSpec((8, h_pad), lambda i, k: (0, 0)),      # packed b1/b2/s/t
        ],
        out_specs=pl.BlockSpec((tm, h_pad), lambda i, k: (i, 0)),
        scratch_shapes=[pltpu.VMEM((tm, h_pad), jnp.float32)],
        compiler_params=pltpu.CompilerParams(
            dimension_semantics=("parallel", "arbitrary"),
            vmem_limit_bytes=_VMEM_LIMIT,
        ),
        cost_estimate=pl.CostEstimate(
            flops=2 * n_pad * n_pad * h_pad + 2 * n_pad * h_pad * h_pad,
            transcendentals=0,
            bytes_accessed=(n_pad * n_pad                      # A_hat int8
                            + 2 * n_pad * h_pad                # XW (read once)
                            + 2 * h_pad * h_pad + 4 * 8 * h_pad
                            + 2 * n_pad * h_pad),              # output
        ),
    )(a_hat, xw, w2, bp)


# --------------------------------------------------------------------------
# Kernel 3 (tiled path): global_add_pool (one-hot matmul) + relu + final Linear
# --------------------------------------------------------------------------
def pool_fc_kernel(p_ref, h_ref, wfc_ref, bfc_ref, out_ref, acc_ref):
    k = pl.program_id(0)

    @pl.when(k == 0)
    def _():
        acc_ref[...] = jnp.zeros_like(acc_ref)

    acc_ref[...] += jnp.dot(
        p_ref[...], h_ref[...], preferred_element_type=jnp.float32
    )

    @pl.when(k == pl.num_programs(0) - 1)
    def _():
        g = jnp.maximum(acc_ref[...], 0.0)   # relu; dropout(p=0.5) = id in eval
        out_ref[...] = jnp.dot(g.astype(wfc_ref.dtype), wfc_ref[...],
                               preferred_element_type=jnp.float32) + bfc_ref[...]


def _pool_fc(p, h, wfc, bfc, *, tk):
    g_pad = p.shape[0]
    n_pad, h_pad = h.shape
    o_pad = wfc.shape[1]
    return pl.pallas_call(
        pool_fc_kernel,
        out_shape=jax.ShapeDtypeStruct((g_pad, o_pad), jnp.float32),
        grid=(n_pad // tk,),
        in_specs=[
            pl.BlockSpec((g_pad, tk), lambda k: (0, k)),
            pl.BlockSpec((tk, h_pad), lambda k: (k, 0)),
            pl.BlockSpec((h_pad, o_pad), lambda k: (0, 0)),
            pl.BlockSpec((1, o_pad), lambda k: (0, 0)),
        ],
        out_specs=pl.BlockSpec((g_pad, o_pad), lambda k: (0, 0)),
        scratch_shapes=[pltpu.VMEM((g_pad, h_pad), jnp.float32)],
        compiler_params=pltpu.CompilerParams(
            dimension_semantics=("arbitrary",),
            vmem_limit_bytes=_VMEM_LIMIT,
        ),
        cost_estimate=pl.CostEstimate(
            flops=2 * g_pad * n_pad * h_pad + 2 * g_pad * h_pad * o_pad,
            transcendentals=0,
            bytes_accessed=2 * (g_pad * n_pad + n_pad * h_pad
                                + h_pad * o_pad) + 4 * g_pad * o_pad,
        ),
    )(p, h, wfc, bfc)


# --------------------------------------------------------------------------
# Fused small-graph kernel: both GIN layers + pool + FC in ONE pallas_call.
# Everything (A_hat, features, weights) fits in VMEM at these sizes.
# --------------------------------------------------------------------------
def gin_fused_kernel(a_ref, x_ref, p_ref, w11_ref, w12_ref, bp1_ref,
                     w21_ref, w22_ref, bp2_ref, wfc_ref, bfc_ref, out_ref):
    a = a_ref[...].astype(jnp.bfloat16)          # int8 -> bf16 once, in VMEM

    def gin_layer(h, w1_ref, w2_ref, bp_ref):
        xw = jnp.dot(h, w1_ref[...], preferred_element_type=jnp.float32)
        agg = jnp.dot(a, xw.astype(jnp.bfloat16),
                      preferred_element_type=jnp.float32)
        z = jnp.maximum(agg + bp_ref[0:1, :], 0.0)
        z = jnp.dot(z.astype(jnp.bfloat16), w2_ref[...],
                    preferred_element_type=jnp.float32) + bp_ref[1:2, :]
        z = jnp.maximum(z, 0.0)
        return (z * bp_ref[2:3, :] + bp_ref[3:4, :]).astype(jnp.bfloat16)

    h = gin_layer(x_ref[...], w11_ref, w12_ref, bp1_ref)
    h = gin_layer(h, w21_ref, w22_ref, bp2_ref)
    g = jnp.maximum(
        jnp.dot(p_ref[...], h, preferred_element_type=jnp.float32), 0.0)
    out_ref[...] = jnp.dot(g.astype(jnp.bfloat16), wfc_ref[...],
                           preferred_element_type=jnp.float32) + bfc_ref[...]


def _gin_fused(a_hat, x, p, w11, w12, bp1, w21, w22, bp2, wfc, bfc):
    n_pad = a_hat.shape[0]
    f_pad = x.shape[1]
    h_pad = w11.shape[1]
    g_pad = p.shape[0]
    o_pad = wfc.shape[1]
    flops = (2 * n_pad * f_pad * h_pad + 4 * n_pad * n_pad * h_pad
             + 6 * n_pad * h_pad * h_pad + 2 * g_pad * n_pad * h_pad
             + 2 * g_pad * h_pad * o_pad)
    bytes_acc = (n_pad * n_pad + 2 * n_pad * f_pad + 2 * g_pad * n_pad
                 + 2 * (f_pad + 3 * h_pad) * h_pad + 2 * h_pad * o_pad
                 + 4 * (16 * h_pad + o_pad) + 4 * g_pad * o_pad)
    return pl.pallas_call(
        gin_fused_kernel,
        out_shape=jax.ShapeDtypeStruct((g_pad, o_pad), jnp.float32),
        compiler_params=pltpu.CompilerParams(vmem_limit_bytes=_VMEM_LIMIT),
        cost_estimate=pl.CostEstimate(
            flops=flops, transcendentals=0, bytes_accessed=bytes_acc),
    )(a_hat, x, p, w11, w12, bp1, w21, w22, bp2, wfc, bfc)


# --------------------------------------------------------------------------
# Wrapper: padding, BN folding, int8 A_hat / bf16 pooling matrix construction,
# path dispatch (fused small-graph kernel vs. tiled multi-kernel pipeline).
# --------------------------------------------------------------------------
def gin_forward(x, edge_index, batch, params, num_graphs, *,
                tile_n=512, small_graph_max=1024):
    assert tile_n % 128 == 0
    n, f = x.shape
    h_dim = params["w11"].shape[1]
    o_dim = params["wfc"].shape[1]
    g = num_graphs

    use_fused = n <= small_graph_max
    if use_fused:
        n_pad = _round_up(n, 128)
        tm = tk = n_pad  # unused on this path
    else:
        tk = tile_n
        n_pad = _round_up(n, tile_n)
        # v7x has 2 TensorCores: keep >= 2 blocks on the "parallel" row axis.
        tm = tile_n if n_pad // tile_n >= 2 else max(128, tile_n // 2)

    f_pad = _round_up(f, 128)
    h_pad = _round_up(h_dim, 128)
    o_pad = _round_up(o_dim, 128)
    g_pad = _round_up(max(g, 8), 8)

    f32, bf16 = jnp.float32, jnp.bfloat16

    # A_hat = A + (1+eps) I, eps = 0.  Stored int8 in HBM (exact for per-pair
    # edge multiplicities <= 127); kernels cast tiles to bf16 on-chip so only
    # one byte per A entry crosses HBM.  Built via int32 scatter-add (robust
    # lowering) then narrowed; for static graphs, cache a_hat/p across calls.
    src, dst = edge_index[0], edge_index[1]
    ids = jnp.arange(n)
    a_cnt = jnp.zeros((n_pad, n_pad), jnp.int32).at[dst, src].add(1)
    a_cnt = a_cnt.at[ids, ids].add(1)
    a_hat = a_cnt.astype(jnp.int8)

    # One-hot pooling matrix P[g, n] (bf16, exact). Padded node columns are 0.
    p = (batch[None, :] == jnp.arange(g_pad, dtype=batch.dtype)[:, None]).astype(bf16)
    p = jnp.pad(p, ((0, 0), (0, n_pad - n)))

    x_pad = jnp.zeros((n_pad, f_pad), bf16).at[:n, :f].set(x.astype(bf16))

    def pad_mat(w, r, c):
        return jnp.zeros((r, c), bf16).at[:w.shape[0], :w.shape[1]].set(w.astype(bf16))

    def pad_row(v, c):
        return jnp.zeros((1, c), f32).at[0, :v.shape[0]].set(v.astype(f32))

    # Fold eval-mode BatchNorm1d into per-channel scale/shift and pack the four
    # per-layer (H,) vectors into a single (8, h_pad) f32 operand (one DMA
    # stream instead of four).  Rows: 0=b1, 1=b2, 2=scale, 3=shift.
    eps_bn = 1e-5
    s1 = params["bn1_gamma"] / jnp.sqrt(params["bn1_var"] + eps_bn)
    t1 = params["bn1_beta"] - params["bn1_mean"] * s1
    s2 = params["bn2_gamma"] / jnp.sqrt(params["bn2_var"] + eps_bn)
    t2 = params["bn2_beta"] - params["bn2_mean"] * s2

    def pack_rows(vs, c):
        out = jnp.zeros((8, c), f32)
        for r, v in enumerate(vs):
            out = out.at[r, :v.shape[0]].set(v.astype(f32))
        return out

    bp1 = pack_rows([params["b11"], params["b12"], s1, t1], h_pad)
    bp2 = pack_rows([params["b21"], params["b22"], s2, t2], h_pad)
    bfc = pad_row(params["bfc"], o_pad)

    w11 = pad_mat(params["w11"], f_pad, h_pad)
    w12 = pad_mat(params["w12"], h_pad, h_pad)
    w21 = pad_mat(params["w21"], h_pad, h_pad)
    w22 = pad_mat(params["w22"], h_pad, h_pad)
    wfc = pad_mat(params["wfc"], h_pad, o_pad)

    if use_fused:
        out = _gin_fused(a_hat, x_pad, p, w11, w12, bp1, w21, w22, bp2, wfc, bfc)
    else:
        # Layer 1:  A_hat @ (x @ W11)  ==  ((1+eps)x + A x) @ W11
        xw1 = _transform(x_pad, w11, tm=tm)
        h1 = _gin_layer(a_hat, xw1, w12, bp1, tm=tm, tk=tk)
        # Layer 2
        xw2 = _transform(h1, w21, tm=tm)
        h2 = _gin_layer(a_hat, xw2, w22, bp2, tm=tm, tk=tk)
        # Pool + relu + fc
        out = _pool_fc(p, h2, wfc, bfc, tk=tk)
    return out[:g, :o_dim]


# --------------------------------------------------------------------------
# Pure-JAX reference (f32) for correctness checking.
# --------------------------------------------------------------------------
def gin_reference(x, edge_index, batch, params, num_graphs):
    n = x.shape[0]
    src, dst = edge_index[0], edge_index[1]
    a = jnp.zeros((n, n), jnp.float32).at[dst, src].add(1.0)
    eps_bn = 1e-5

    def layer(h, w1, b1, w2, b2, gamma, beta, mean, var):
        agg = h + a @ h
        z = jnp.maximum(agg @ w1 + b1, 0.0)
        z = z @ w2 + b2
        z = jnp.maximum(z, 0.0)
        s = gamma / jnp.sqrt(var + eps_bn)
        return z * s + (beta - mean * s)

    h = layer(x, params["w11"], params["b11"], params["w12"], params["b12"],
              params["bn1_gamma"], params["bn1_beta"],
              params["bn1_mean"], params["bn1_var"])
    h = layer(h, params["w21"], params["b21"], params["w22"], params["b22"],
              params["bn2_gamma"], params["bn2_beta"],
              params["bn2_mean"], params["bn2_var"])
    pool = (batch[None, :] == jnp.arange(num_graphs, dtype=batch.dtype)[:, None])
    g = jnp.maximum(pool.astype(jnp.float32) @ h, 0.0)
    return g @ params["wfc"] + params["bfc"]


def init_params(key, num_features, hidden, out_features):
    ks = jax.random.split(key, 12)

    def w(k, shape):
        return (0.1 * jax.random.normal(k, shape)).astype(jnp.float32)

    hh = hidden
    return {
        "w11": w(ks[0], (num_features, hh)), "b11": w(ks[1], (hh,)),
        "w12": w(ks[2], (hh, hh)),           "b12": w(ks[3], (hh,)),
        "w21": w(ks[4], (hh, hh)),           "b21": w(ks[5], (hh,)),
        "w22": w(ks[6], (hh, hh)),           "b22": w(ks[7], (hh,)),
        "bn1_gamma": jnp.full((hh,), 1.1, jnp.float32),
        "bn1_beta":  jnp.full((hh,), 0.05, jnp.float32),
        "bn1_mean":  0.01 * jnp.arange(hh, dtype=jnp.float32),
        "bn1_var":   jnp.full((hh,), 0.9, jnp.float32),
        "bn2_gamma": jnp.full((hh,), 0.95, jnp.float32),
        "bn2_beta":  jnp.full((hh,), -0.02, jnp.float32),
        "bn2_mean":  0.02 * jnp.arange(hh, dtype=jnp.float32),
        "bn2_var":   jnp.full((hh,), 1.2, jnp.float32),
        "wfc": w(ks[8], (hh, out_features)), "bfc": w(ks[9], (out_features,)),
    }


if __name__ == "__main__":
    key = jax.random.PRNGKey(0)

    # ---- Test 1: small graph -> fully fused single-kernel path ------------
    N, F, H, O, G, E = 16, 8, 32, 4, 2, 24
    k_x, k_e, k_p = jax.random.split(key, 3)
    x = jax.random.normal(k_x, (N, F), jnp.float32)
    edge_index = jax.random.randint(k_e, (2, E), 0, N, jnp.int32)
    batch = jnp.concatenate(
        [jnp.zeros(N // 2, jnp.int32), jnp.ones(N - N // 2, jnp.int32)])
    params = init_params(k_p, F, H, O)

    gin_small = jax.jit(functools.partial(gin_forward, num_graphs=G))
    out = jax.block_until_ready(gin_small(x, edge_index, batch, params))
    assert out.shape == (G, O)
    ref = gin_reference(x, edge_index, batch, params, G)
    assert jnp.allclose(out, ref, rtol=1e-1, atol=1e-1), (out, ref)

    # ---- Test 2: force the tiled multi-kernel path (int8 A, resident XW) --
    N2, G2, E2 = 300, 3, 900
    k_x2, k_e2 = jax.random.split(jax.random.PRNGKey(1), 2)
    x2 = jax.random.normal(k_x2, (N2, F), jnp.float32)
    edge_index2 = jax.random.randint(k_e2, (2, E2), 0, N2, jnp.int32)
    batch2 = jnp.repeat(jnp.arange(G2, dtype=jnp.int32), N2 // G2)

    gin_tiled = jax.jit(functools.partial(
        gin_forward, num_graphs=G2, tile_n=128, small_graph_max=0))
    out2 = jax.block_until_ready(gin_tiled(x2, edge_index2, batch2, params))
    assert out2.shape == (G2, O)
    ref2 = gin_reference(x2, edge_index2, batch2, params, G2)
    err = jnp.max(jnp.abs(out2 - ref2))
    scale = jnp.maximum(jnp.max(jnp.abs(ref2)), 1.0)
    assert err <= 5e-2 * scale, (err, scale, out2, ref2)

    print("KERNEL_OK")
</pallas_src>

<mosaic_0001>
module attributes {stable_mosaic.version = 11 : i64} {
  func.func @gin_fused_kernel(%arg0: memref<128x128xi8, #tpu.memory_space<vmem>>, %arg1: memref<128x128xbf16, #tpu.memory_space<vmem>>, %arg2: memref<8x128xbf16, #tpu.memory_space<vmem>>, %arg3: memref<128x128xbf16, #tpu.memory_space<vmem>>, %arg4: memref<128x128xbf16, #tpu.memory_space<vmem>>, %arg5: memref<8x128xf32, #tpu.memory_space<vmem>>, %arg6: memref<128x128xbf16, #tpu.memory_space<vmem>>, %arg7: memref<128x128xbf16, #tpu.memory_space<vmem>>, %arg8: memref<8x128xf32, #tpu.memory_space<vmem>>, %arg9: memref<128x128xbf16, #tpu.memory_space<vmem>>, %arg10: memref<1x128xf32, #tpu.memory_space<vmem>>, %arg11: memref<8x128xf32, #tpu.memory_space<vmem>>) attributes {dimension_semantics = [], scalar_prefetch = 0 : i64, scratch_operands = 0 : i64, tpu.core_type = #tpu.core_type<tc>} {
    %c0 = arith.constant 0 : index
    %c0_0 = arith.constant 0 : index
    %0 = vector.load %arg0[%c0, %c0_0] : memref<128x128xi8, #tpu.memory_space<vmem>>, vector<128x128xi8>
    %1 = arith.sitofp %0 : vector<128x128xi8> to vector<128x128xbf16>
    %c0_1 = arith.constant 0 : index
    %c0_2 = arith.constant 0 : index
    %2 = vector.load %arg1[%c0_1, %c0_2] : memref<128x128xbf16, #tpu.memory_space<vmem>>, vector<128x128xbf16>
    %c0_3 = arith.constant 0 : index
    %c0_4 = arith.constant 0 : index
    %3 = vector.load %arg3[%c0_3, %c0_4] : memref<128x128xbf16, #tpu.memory_space<vmem>>, vector<128x128xbf16>
    %cst = arith.constant dense<0.000000e+00> : vector<128x128xf32>
    %4 = tpu.matmul %2, %3, %cst {dimension_numbers = #tpu.dot_dimension_numbers<[1], [0], [0], [1], [0, 0, 1, 1], [], []>} : vector<128x128xbf16>, vector<128x128xbf16>, vector<128x128xf32> -> vector<128x128xf32>
    %5 = arith.truncf %4 : vector<128x128xf32> to vector<128x128xbf16>
    %cst_5 = arith.constant dense<0.000000e+00> : vector<128x128xf32>
    %6 = tpu.matmul %1, %5, %cst_5 {dimension_numbers = #tpu.dot_dimension_numbers<[1], [0], [0], [1], [0, 0, 1, 1], [], []>} : vector<128x128xbf16>, vector<128x128xbf16>, vector<128x128xf32> -> vector<128x128xf32>
    %c0_6 = arith.constant 0 : index
    %c0_7 = arith.constant 0 : index
    %7 = vector.load %arg5[%c0_6, %c0_7] : memref<8x128xf32, #tpu.memory_space<vmem>>, vector<1x128xf32>
    %8 = vector.broadcast %7 : vector<1x128xf32> to vector<128x128xf32>
    %9 = arith.addf %6, %8 : vector<128x128xf32>
    %cst_8 = arith.constant 0.000000e+00 : f32
    %10 = vector.broadcast %cst_8 : f32 to vector<128x128xf32>
    %11 = arith.maximumf %9, %10 : vector<128x128xf32>
    %12 = arith.truncf %11 : vector<128x128xf32> to vector<128x128xbf16>
    %c0_9 = arith.constant 0 : index
    %c0_10 = arith.constant 0 : index
    %13 = vector.load %arg4[%c0_9, %c0_10] : memref<128x128xbf16, #tpu.memory_space<vmem>>, vector<128x128xbf16>
    %cst_11 = arith.constant dense<0.000000e+00> : vector<128x128xf32>
    %14 = tpu.matmul %12, %13, %cst_11 {dimension_numbers = #tpu.dot_dimension_numbers<[1], [0], [0], [1], [0, 0, 1, 1], [], []>} : vector<128x128xbf16>, vector<128x128xbf16>, vector<128x128xf32> -> vector<128x128xf32>
    %c1 = arith.constant 1 : index
    %c0_12 = arith.constant 0 : index
    %15 = vector.load %arg5[%c1, %c0_12] : memref<8x128xf32, #tpu.memory_space<vmem>>, vector<1x128xf32>
    %16 = vector.broadcast %15 : vector<1x128xf32> to vector<128x128xf32>
    %17 = arith.addf %14, %16 : vector<128x128xf32>
    %cst_13 = arith.constant 0.000000e+00 : f32
    %18 = vector.broadcast %cst_13 : f32 to vector<128x128xf32>
    %19 = arith.maximumf %17, %18 : vector<128x128xf32>
    %c2 = arith.constant 2 : index
    %c0_14 = arith.constant 0 : index
    %20 = vector.load %arg5[%c2, %c0_14] : memref<8x128xf32, #tpu.memory_space<vmem>>, vector<1x128xf32>
    %21 = vector.broadcast %20 : vector<1x128xf32> to vector<128x128xf32>
    %22 = arith.mulf %19, %21 : vector<128x128xf32>
    %c3 = arith.constant 3 : index
    %c0_15 = arith.constant 0 : index
    %23 = vector.load %arg5[%c3, %c0_15] : memref<8x128xf32, #tpu.memory_space<vmem>>, vector<1x128xf32>
    %24 = vector.broadcast %23 : vector<1x128xf32> to vector<128x128xf32>
    %25 = arith.addf %22, %24 : vector<128x128xf32>
    %26 = arith.truncf %25 : vector<128x128xf32> to vector<128x128xbf16>
    %c0_16 = arith.constant 0 : index
    %c0_17 = arith.constant 0 : index
    %27 = vector.load %arg6[%c0_16, %c0_17] : memref<128x128xbf16, #tpu.memory_space<vmem>>, vector<128x128xbf16>
    %cst_18 = arith.constant dense<0.000000e+00> : vector<128x128xf32>
    %28 = tpu.matmul %26, %27, %cst_18 {dimension_numbers = #tpu.dot_dimension_numbers<[1], [0], [0], [1], [0, 0, 1, 1], [], []>} : vector<128x128xbf16>, vector<128x128xbf16>, vector<128x128xf32> -> vector<128x128xf32>
    %29 = arith.truncf %28 : vector<128x128xf32> to vector<128x128xbf16>
    %cst_19 = arith.constant dense<0.000000e+00> : vector<128x128xf32>
    %30 = tpu.matmul %1, %29, %cst_19 {dimension_numbers = #tpu.dot_dimension_numbers<[1], [0], [0], [1], [0, 0, 1, 1], [], []>} : vector<128x128xbf16>, vector<128x128xbf16>, vector<128x128xf32> -> vector<128x128xf32>
    %c0_20 = arith.constant 0 : index
    %c0_21 = arith.constant 0 : index
    %31 = vector.load %arg8[%c0_20, %c0_21] : memref<8x128xf32, #tpu.memory_space<vmem>>, vector<1x128xf32>
    %32 = vector.broadcast %31 : vector<1x128xf32> to vector<128x128xf32>
    %33 = arith.addf %30, %32 : vector<128x128xf32>
    %cst_22 = arith.constant 0.000000e+00 : f32
    %34 = vector.broadcast %cst_22 : f32 to vector<128x128xf32>
    %35 = arith.maximumf %33, %34 : vector<128x128xf32>
    %36 = arith.truncf %35 : vector<128x128xf32> to vector<128x128xbf16>
    %c0_23 = arith.constant 0 : index
    %c0_24 = arith.constant 0 : index
    %37 = vector.load %arg7[%c0_23, %c0_24] : memref<128x128xbf16, #tpu.memory_space<vmem>>, vector<128x128xbf16>
    %cst_25 = arith.constant dense<0.000000e+00> : vector<128x128xf32>
    %38 = tpu.matmul %36, %37, %cst_25 {dimension_numbers = #tpu.dot_dimension_numbers<[1], [0], [0], [1], [0, 0, 1, 1], [], []>} : vector<128x128xbf16>, vector<128x128xbf16>, vector<128x128xf32> -> vector<128x128xf32>
    %c1_26 = arith.constant 1 : index
    %c0_27 = arith.constant 0 : index
    %39 = vector.load %arg8[%c1_26, %c0_27] : memref<8x128xf32, #tpu.memory_space<vmem>>, vector<1x128xf32>
    %40 = vector.broadcast %39 : vector<1x128xf32> to vector<128x128xf32>
    %41 = arith.addf %38, %40 : vector<128x128xf32>
    %cst_28 = arith.constant 0.000000e+00 : f32
    %42 = vector.broadcast %cst_28 : f32 to vector<128x128xf32>
    %43 = arith.maximumf %41, %42 : vector<128x128xf32>
    %c2_29 = arith.constant 2 : index
    %c0_30 = arith.constant 0 : index
    %44 = vector.load %arg8[%c2_29, %c0_30] : memref<8x128xf32, #tpu.memory_space<vmem>>, vector<1x128xf32>
    %45 = vector.broadcast %44 : vector<1x128xf32> to vector<128x128xf32>
    %46 = arith.mulf %43, %45 : vector<128x128xf32>
    %c3_31 = arith.constant 3 : index
    %c0_32 = arith.constant 0 : index
    %47 = vector.load %arg8[%c3_31, %c0_32] : memref<8x128xf32, #tpu.memory_space<vmem>>, vector<1x128xf32>
    %48 = vector.broadcast %47 : vector<1x128xf32> to vector<128x128xf32>
    %49 = arith.addf %46, %48 : vector<128x128xf32>
    %50 = arith.truncf %49 : vector<128x128xf32> to vector<128x128xbf16>
    %c0_33 = arith.constant 0 : index
    %c0_34 = arith.constant 0 : index
    %51 = vector.load %arg2[%c0_33, %c0_34] : memref<8x128xbf16, #tpu.memory_space<vmem>>, vector<8x128xbf16>
    %cst_35 = arith.constant dense<0.000000e+00> : vector<8x128xf32>
    %52 = tpu.matmul %51, %50, %cst_35 {dimension_numbers = #tpu.dot_dimension_numbers<[1], [0], [0], [1], [0, 0, 1, 1], [], []>} : vector<8x128xbf16>, vector<128x128xbf16>, vector<8x128xf32> -> vector<8x128xf32>
    %cst_36 = arith.constant 0.000000e+00 : f32
    %53 = vector.broadcast %cst_36 : f32 to vector<8x128xf32>
    %54 = arith.maximumf %52, %53 : vector<8x128xf32>
    %55 = arith.truncf %54 : vector<8x128xf32> to vector<8x128xbf16>
    %c0_37 = arith.constant 0 : index
    %c0_38 = arith.constant 0 : index
    %56 = vector.load %arg9[%c0_37, %c0_38] : memref<128x128xbf16, #tpu.memory_space<vmem>>, vector<128x128xbf16>
    %cst_39 = arith.constant dense<0.000000e+00> : vector<8x128xf32>
    %57 = tpu.matmul %55, %56, %cst_39 {dimension_numbers = #tpu.dot_dimension_numbers<[1], [0], [0], [1], [0, 0, 1, 1], [], []>} : vector<8x128xbf16>, vector<128x128xbf16>, vector<8x128xf32> -> vector<8x128xf32>
    %c0_40 = arith.constant 0 : index
    %c0_41 = arith.constant 0 : index
    %58 = vector.load %arg10[%c0_40, %c0_41] : memref<1x128xf32, #tpu.memory_space<vmem>>, vector<1x128xf32>
    %59 = vector.broadcast %58 : vector<1x128xf32> to vector<8x128xf32>
    %60 = arith.addf %57, %59 : vector<8x128xf32>
    %c0_42 = arith.constant 0 : index
    %c0_43 = arith.constant 0 : index
    %61 = vector.load %arg11[%c0_42, %c0_43] : memref<8x128xf32, #tpu.memory_space<vmem>>, vector<8x128xf32>
    tpu.vector_store %arg11[%c0_42, %c0_43], %60 {strides = array<i32>} : memref<8x128xf32, #tpu.memory_space<vmem>>, vector<8x128xf32>,
    return
  }
}

</mosaic_0001>

<llo_original>
// kernel: gin_forward.1
$region0: #{gin_forward.1}
  #allocation0 [shape = 'u32[]', space=smem, size = 0x4, offset = 0x4, fixed_abs, tag = 'smem constant byte address 0x4 - core index']
  #allocation1 [shape = 'u32[72,128]{1,0:T(1,128)}', space=vmem, size = 0x9000, scoped, tag = 'internal scratch']
  %s0 = inlined_call_operand.vmem [shape: s8[128,128], index: 0, kind: input, shape index: {}]
  %s1 = inlined_call_operand.vmem [shape: bf16[128,128], index: 1, kind: input, shape index: {}]
  %s2 = inlined_call_operand.vmem [shape: bf16[8,128], index: 2, kind: input, shape index: {}]
  %s3 = inlined_call_operand.vmem [shape: bf16[128,128], index: 3, kind: input, shape index: {}]
  %s4 = inlined_call_operand.vmem [shape: bf16[128,128], index: 4, kind: input, shape index: {}]
  %s5 = inlined_call_operand.vmem [shape: f32[8,128], index: 5, kind: input, shape index: {}]
  %s6 = inlined_call_operand.vmem [shape: bf16[128,128], index: 6, kind: input, shape index: {}]
  %s7 = inlined_call_operand.vmem [shape: bf16[128,128], index: 7, kind: input, shape index: {}]
  %s8 = inlined_call_operand.vmem [shape: f32[8,128], index: 8, kind: input, shape index: {}]
  %s9 = inlined_call_operand.vmem [shape: bf16[128,128], index: 9, kind: input, shape index: {}]
  %s10 = inlined_call_operand.vmem [shape: f32[1,128], index: 10, kind: input, shape index: {}]
  %s11 = inlined_call_operand.vmem [shape: f32[8,128], index: 11, kind: output, shape index: {}]
  %s12 = sld [smem:[#allocation0]]
  $region54: #{gin_forward.1} parent=0
    _
  %s14 = ssub.s32 1, %s12
  %s15 = scalar_select 0, %s14, %s12
  // Predicated region
  $region2: #{gin_forward.1} parent=0 // pred_check
    _
  $region3: #{gin_forward.1} parent=0 // pred_check_branch
    %17 = sbr.rel (0) target = $region5
  $region4: #{gin_forward.1} parent=0 // pred_region
    _
  $region5: #{gin_forward.1} parent=0 // pred_fallthru
    _
  // Predicated region
  $region6: #{gin_forward.1} parent=0 // pred_check
    _
  $region7: #{gin_forward.1} parent=0 // pred_check_branch
    %19 = sbr.rel (0) target = $region9
  $region8: #{gin_forward.1} parent=0 // pred_region
    _
  $region9: #{gin_forward.1} parent=0 // pred_fallthru
    _
  // Predicated region
  $region10: #{gin_forward.1} parent=0 // pred_check
    _
  $region11: #{gin_forward.1} parent=0 // pred_check_branch
    %21 = sbr.rel (0) target = $region13
  $region12: #{gin_forward.1} parent=0 // pred_region
    _
  $region13: #{gin_forward.1} parent=0 // pred_fallthru
    _
  // Predicated region
  $region14: #{gin_forward.1} parent=0 // pred_check
    _
  $region15: #{gin_forward.1} parent=0 // pred_check_branch
    %23 = sbr.rel (0) target = $region17
  $region16: #{gin_forward.1} parent=0 // pred_region
    _
  $region17: #{gin_forward.1} parent=0 // pred_fallthru
    _
  // Predicated region
  $region18: #{gin_forward.1} parent=0 // pred_check
    _
  $region19: #{gin_forward.1} parent=0 // pred_check_branch
    %25 = sbr.rel (0) target = $region21
  $region20: #{gin_forward.1} parent=0 // pred_region
    _
  $region21: #{gin_forward.1} parent=0 // pred_fallthru
    _
  // Predicated region
  $region22: #{gin_forward.1} parent=0 // pred_check
    _
  $region23: #{gin_forward.1} parent=0 // pred_check_branch
    %27 = sbr.rel (0) target = $region25
  $region24: #{gin_forward.1} parent=0 // pred_region
    _
  $region25: #{gin_forward.1} parent=0 // pred_fallthru
    _
  // Predicated region
  $region26: #{gin_forward.1} parent=0 // pred_check
    _
  $region27: #{gin_forward.1} parent=0 // pred_check_branch
    %29 = sbr.rel (0) target = $region29
  $region28: #{gin_forward.1} parent=0 // pred_region
    _
  $region29: #{gin_forward.1} parent=0 // pred_fallthru
    _
  // Predicated region
  $region30: #{gin_forward.1} parent=0 // pred_check
    _
  $region31: #{gin_forward.1} parent=0 // pred_check_branch
    %31 = sbr.rel (0) target = $region33
  $region32: #{gin_forward.1} parent=0 // pred_region
    _
  $region33: #{gin_forward.1} parent=0 // pred_fallthru
    _
  // Predicated region
  $region34: #{gin_forward.1} parent=0 // pred_check
    _
  $region35: #{gin_forward.1} parent=0 // pred_check_branch
    %33 = sbr.rel (0) target = $region37
  $region36: #{gin_forward.1} parent=0 // pred_region
    _
  $region37: #{gin_forward.1} parent=0 // pred_fallthru
    _
  // Predicated region
  $region38: #{gin_forward.1} parent=0 // pred_check
    _
  $region39: #{gin_forward.1} parent=0 // pred_check_branch
    %35 = sbr.rel (0) target = $region41
  $region40: #{gin_forward.1} parent=0 // pred_region
    _
  $region41: #{gin_forward.1} parent=0 // pred_fallthru
    _
  // Predicated region
  $region42: #{gin_forward.1} parent=0 // pred_check
    _
  $region43: #{gin_forward.1} parent=0 // pred_check_branch
    %37 = sbr.rel (0) target = $region45
  $region44: #{gin_forward.1} parent=0 // pred_region
    _
  $region45: #{gin_forward.1} parent=0 // pred_fallthru
    _
  %v38 = vld [vmem:[%s0] sm:$0xff]
  %v39 = vld [vmem:[%s0 + $0x8] sm:$0xff]
  %v40 = vld [vmem:[%s0 + $0x10] sm:$0xff]
  %v41 = vld [vmem:[%s0 + $0x18] sm:$0xff]
  %v42 = vunpack.c.0.s8 %v38
  %v43 = vunpack.c.1.s8 %v38
  %v44 = vunpack.c.2.s8 %v38
  %v45 = vunpack.c.3.s8 %v38
  %v46 = vunpack.c.0.s8 %v39
  %v47 = vunpack.c.1.s8 %v39
  %v48 = vunpack.c.2.s8 %v39
  %v49 = vunpack.c.3.s8 %v39
  %v50 = vunpack.c.0.s8 %v40
  %v51 = vunpack.c.1.s8 %v40
  %v52 = vunpack.c.2.s8 %v40
  %v53 = vunpack.c.3.s8 %v40
  %v54 = vunpack.c.0.s8 %v41
  %v55 = vunpack.c.1.s8 %v41
  %v56 = vunpack.c.2.s8 %v41
  %v57 = vunpack.c.3.s8 %v41
  %v58 = vcvt.s32.f32 %v42
  %v59 = vcvt.s32.f32 %v43
  %v60 = vcvt.s32.f32 %v44
  %v61 = vcvt.s32.f32 %v45
  %v62 = vcvt.s32.f32 %v46
  %v63 = vcvt.s32.f32 %v47
  %v64 = vcvt.s32.f32 %v48
  %v65 = vcvt.s32.f32 %v49
  %v66 = vcvt.s32.f32 %v50
  %v67 = vcvt.s32.f32 %v51
  %v68 = vcvt.s32.f32 %v52
  %v69 = vcvt.s32.f32 %v53
  %v70 = vcvt.s32.f32 %v54
  %v71 = vcvt.s32.f32 %v55
  %v72 = vcvt.s32.f32 %v56
  %v73 = vcvt.s32.f32 %v57
  %v74 = vpack.c.bf16 %v59, %v58
  %v75 = vpack.c.bf16 %v61, %v60
  %v76 = vpack.c.bf16 %v63, %v62
  %v77 = vpack.c.bf16 %v65, %v64
  %v78 = vpack.c.bf16 %v67, %v66
  %v79 = vpack.c.bf16 %v69, %v68
  %v80 = vpack.c.bf16 %v71, %v70
  %v81 = vpack.c.bf16 %v73, %v72
  %v82 = vld [vmem:[%s1] sm:$0xf]
  %v83 = vld [vmem:[%s1 + $0x4] sm:$0xf]
  %v84 = vld [vmem:[%s1 + $0x8] sm:$0xf]
  %v85 = vld [vmem:[%s1 + $0xc] sm:$0xf]
  %v86 = vld [vmem:[%s1 + $0x10] sm:$0xf]
  %v87 = vld [vmem:[%s1 + $0x14] sm:$0xf]
  %v88 = vld [vmem:[%s1 + $0x18] sm:$0xf]
  %v89 = vld [vmem:[%s1 + $0x1c] sm:$0xf]
  %v90 = vld [vmem:[%s1 + $0x20] sm:$0xf]
  %v91 = vld [vmem:[%s1 + $0x24] sm:$0xf]
  %v92 = vld [vmem:[%s1 + $0x28] sm:$0xf]
  %v93 = vld [vmem:[%s1 + $0x2c] sm:$0xf]
  %v94 = vld [vmem:[%s1 + $0x30] sm:$0xf]
  %v95 = vld [vmem:[%s1 + $0x34] sm:$0xf]
  %v96 = vld [vmem:[%s1 + $0x38] sm:$0xf]
  %v97 = vld [vmem:[%s1 + $0x3c] sm:$0xf]
  %v98 = vld [vmem:[%s3] sm:$0xf]
  %v99 = vld [vmem:[%s3 + $0x4] sm:$0xf]
  %v100 = vld [vmem:[%s3 + $0x8] sm:$0xf]
  %v101 = vld [vmem:[%s3 + $0xc] sm:$0xf]
  %v102 = vld [vmem:[%s3 + $0x10] sm:$0xf]
  %v103 = vld [vmem:[%s3 + $0x14] sm:$0xf]
  %v104 = vld [vmem:[%s3 + $0x18] sm:$0xf]
  %v105 = vld [vmem:[%s3 + $0x1c] sm:$0xf]
  %v106 = vld [vmem:[%s3 + $0x20] sm:$0xf]
  %v107 = vld [vmem:[%s3 + $0x24] sm:$0xf]
  %v108 = vld [vmem:[%s3 + $0x28] sm:$0xf]
  %v109 = vld [vmem:[%s3 + $0x2c] sm:$0xf]
  %v110 = vld [vmem:[%s3 + $0x30] sm:$0xf]
  %v111 = vld [vmem:[%s3 + $0x34] sm:$0xf]
  %v112 = vld [vmem:[%s3 + $0x38] sm:$0xf]
  %v113 = vld [vmem:[%s3 + $0x3c] sm:$0xf]
  %v130 = vunpack.c.l.b16 %v82
  %v131 = vunpack.c.l.b16 %v83
  %v132 = vunpack.c.l.b16 %v84
  %v133 = vunpack.c.l.b16 %v85
  %v134 = vunpack.c.l.b16 %v86
  %v135 = vunpack.c.l.b16 %v87
  %v136 = vunpack.c.l.b16 %v88
  %v137 = vunpack.c.l.b16 %v89
  %v138 = vunpack.c.l.b16 %v90
  %v139 = vunpack.c.l.b16 %v91
  %v140 = vunpack.c.l.b16 %v92
  %v141 = vunpack.c.l.b16 %v93
  %v142 = vunpack.c.l.b16 %v94
  %v143 = vunpack.c.l.b16 %v95
  %v144 = vunpack.c.l.b16 %v96
  %v145 = vunpack.c.l.b16 %v97
  %v146 = vpack.c.b16 %v131, %v130
  %v147 = vpack.c.b16 %v133, %v132
  %v148 = vpack.c.b16 %v135, %v134
  %v149 = vpack.c.b16 %v137, %v136
  %v150 = vpack.c.b16 %v139, %v138
  %v151 = vpack.c.b16 %v141, %v140
  %v152 = vpack.c.b16 %v143, %v142
  %v153 = vpack.c.b16 %v145, %v144
  %v178 = vunpack.c.l.b16 %v98
  %v179 = vunpack.c.l.b16 %v99
  %v180 = vunpack.c.l.b16 %v100
  %v181 = vunpack.c.l.b16 %v101
  %v182 = vunpack.c.l.b16 %v102
  %v183 = vunpack.c.l.b16 %v103
  %v184 = vunpack.c.l.b16 %v104
  %v185 = vunpack.c.l.b16 %v105
  %v186 = vunpack.c.l.b16 %v106
  %v187 = vunpack.c.l.b16 %v107
  %v188 = vunpack.c.l.b16 %v108
  %v189 = vunpack.c.l.b16 %v109
  %v190 = vunpack.c.l.b16 %v110
  %v191 = vunpack.c.l.b16 %v111
  %v192 = vunpack.c.l.b16 %v112
  %v193 = vunpack.c.l.b16 %v113
  %v194 = vpack.c.b16 %v179, %v178
  %v195 = vpack.c.b16 %v181, %v180
  %v196 = vpack.c.b16 %v183, %v182
  %v197 = vpack.c.b16 %v185, %v184
  %v198 = vpack.c.b16 %v187, %v186
  %v199 = vpack.c.b16 %v189, %v188
  %v200 = vpack.c.b16 %v191, %v190
  %v201 = vpack.c.b16 %v193, %v192
  %210 = vmatpush.bf16.msra.mxu0 %v201
  %211 = vmatpush.bf16.msra.mxu0 %v200
  %212 = vmatpush.bf16.msra.mxu0 %v199
  %213 = vmatpush.bf16.msra.mxu0 %v198
  %214 = vmatpush.bf16.msra.mxu0 %v197
  %215 = vmatpush.bf16.msra.mxu0 %v196
  %216 = vmatpush.bf16.msra.mxu0 %v195
  %217 = vmatpush.bf16.msra.mxu0 %v194
  %218 = vmatmul.bf16.gmra.mxu0 %v146
  %v219 = vpop.f32.mrf.mxu0
  %v220 = vadd.f32 0.0, %v219
  %v221 = vpop.f32.mrf.mxu0
  %v222 = vadd.f32 0.0, %v221
  %223 = vmatmul.bf16.gmra.mxu0 %v147
  %v224 = vpop.f32.mrf.mxu0
  %v225 = vadd.f32 0.0, %v224
  %v226 = vpop.f32.mrf.mxu0
  %v227 = vadd.f32 0.0, %v226
  %228 = vmatmul.bf16.gmra.mxu0 %v148
  %v229 = vpop.f32.mrf.mxu0
  %v230 = vadd.f32 0.0, %v229
  %v231 = vpop.f32.mrf.mxu0
  %v232 = vadd.f32 0.0, %v231
  %233 = vmatmul.bf16.gmra.mxu0 %v149
  %v234 = vpop.f32.mrf.mxu0
  %v235 = vadd.f32 0.0, %v234
  %v236 = vpop.f32.mrf.mxu0
  %v237 = vadd.f32 0.0, %v236
  %238 = vmatmul.bf16.gmra.mxu0 %v150
  %v239 = vpop.f32.mrf.mxu0
  %v240 = vadd.f32 0.0, %v239
  %v241 = vpop.f32.mrf.mxu0
  %v242 = vadd.f32 0.0, %v241
  %243 = vmatmul.bf16.gmra.mxu0 %v151
  %v244 = vpop.f32.mrf.mxu0
  %v245 = vadd.f32 0.0, %v244
  %v246 = vpop.f32.mrf.mxu0
  %v247 = vadd.f32 0.0, %v246
  %248 = vmatmul.bf16.gmra.mxu0 %v152
  %v249 = vpop.f32.mrf.mxu0
  %v250 = vadd.f32 0.0, %v249
  %v251 = vpop.f32.mrf.mxu0
  %v252 = vadd.f32 0.0, %v251
  %253 = vmatmul.bf16.gmra.mxu0 %v153
  %v254 = vpop.f32.mrf.mxu0
  %v255 = vadd.f32 0.0, %v254
  %v256 = vpop.f32.mrf.mxu0
  %v257 = vadd.f32 0.0, %v256
  %258 = vdwg.mxu0
  %v259 = vpack.c.bf16 %v222, %v220
  %v260 = vpack.c.bf16 %v227, %v225
  %v261 = vpack.c.bf16 %v232, %v230
  %v262 = vpack.c.bf16 %v237, %v235
  %v263 = vpack.c.bf16 %v242, %v240
  %v264 = vpack.c.bf16 %v247, %v245
  %v265 = vpack.c.bf16 %v252, %v250
  %v266 = vpack.c.bf16 %v257, %v255
  %v267 = vld [vmem:[%s5] sm:$0x1]
  %v268 = vperm.slane %v267, 0
  %269 = vmatpush.bf16.msra.mxu0 %v266
  %270 = vmatpush.bf16.msra.mxu0 %v265
  %271 = vmatpush.bf16.msra.mxu0 %v264
  %272 = vmatpush.bf16.msra.mxu0 %v263
  %273 = vmatpush.bf16.msra.mxu0 %v262
  %274 = vmatpush.bf16.msra.mxu0 %v261
  %275 = vmatpush.bf16.msra.mxu0 %v260
  %276 = vmatpush.bf16.msra.mxu0 %v259
  %277 = vmatmul.bf16.gmra.mxu0 %v74
  %v278 = vpop.f32.mrf.mxu0
  %v279 = vadd.f32 %v268, %v278
  %v280 = vpop.f32.mrf.mxu0
  %v281 = vadd.f32 %v268, %v280
  %282 = vmatmul.bf16.gmra.mxu0 %v75
  %v283 = vpop.f32.mrf.mxu0
  %v284 = vadd.f32 %v268, %v283
  %v285 = vpop.f32.mrf.mxu0
  %v286 = vadd.f32 %v268, %v285
  %287 = vmatmul.bf16.gmra.mxu0 %v76
  %v288 = vpop.f32.mrf.mxu0
  %v289 = vadd.f32 %v268, %v288
  %v290 = vpop.f32.mrf.mxu0
  %v291 = vadd.f32 %v268, %v290
  %292 = vmatmul.bf16.gmra.mxu0 %v77
  %v293 = vpop.f32.mrf.mxu0
  %v294 = vadd.f32 %v268, %v293
  %v295 = vpop.f32.mrf.mxu0
  %v296 = vadd.f32 %v268, %v295
  %297 = vmatmul.bf16.gmra.mxu0 %v78
  %v298 = vpop.f32.mrf.mxu0
  %v299 = vadd.f32 %v268, %v298
  %v300 = vpop.f32.mrf.mxu0
  %v301 = vadd.f32 %v268, %v300
  %302 = vmatmul.bf16.gmra.mxu0 %v79
  %v303 = vpop.f32.mrf.mxu0
  %v304 = vadd.f32 %v268, %v303
  %v305 = vpop.f32.mrf.mxu0
  %v306 = vadd.f32 %v268, %v305
  %307 = vmatmul.bf16.gmra.mxu0 %v80
  %v308 = vpop.f32.mrf.mxu0
  %v309 = vadd.f32 %v268, %v308
  %v310 = vpop.f32.mrf.mxu0
  %v311 = vadd.f32 %v268, %v310
  %312 = vmatmul.bf16.gmra.mxu0 %v81
  %v313 = vpop.f32.mrf.mxu0
  %v314 = vadd.f32 %v268, %v313
  %v315 = vpop.f32.mrf.mxu0
  %v316 = vadd.f32 %v268, %v315
  %317 = vdwg.mxu0
  %v318 = vmax.f32 %v279, 0.0
  %v319 = vmax.f32 %v281, 0.0
  %v320 = vmax.f32 %v284, 0.0
  %v321 = vmax.f32 %v286, 0.0
  %v322 = vmax.f32 %v289, 0.0
  %v323 = vmax.f32 %v291, 0.0
  %v324 = vmax.f32 %v294, 0.0
  %v325 = vmax.f32 %v296, 0.0
  %v326 = vmax.f32 %v299, 0.0
  %v327 = vmax.f32 %v301, 0.0
  %v328 = vmax.f32 %v304, 0.0
  %v329 = vmax.f32 %v306, 0.0
  %v330 = vmax.f32 %v309, 0.0
  %v331 = vmax.f32 %v311, 0.0
  %v332 = vmax.f32 %v314, 0.0
  %v333 = vmax.f32 %v316, 0.0
  %v334 = vpack.c.bf16 %v319, %v318
  %v335 = vpack.c.bf16 %v321, %v320
  %v336 = vpack.c.bf16 %v323, %v322
  %v337 = vpack.c.bf16 %v325, %v324
  %v338 = vpack.c.bf16 %v327, %v326
  %v339 = vpack.c.bf16 %v329, %v328
  %v340 = vpack.c.bf16 %v331, %v330
  %v341 = vpack.c.bf16 %v333, %v332
  %v342 = vld [vmem:[%s4] sm:$0xf]
  %v343 = vld [vmem:[%s4 + $0x4] sm:$0xf]
  %v344 = vld [vmem:[%s4 + $0x8] sm:$0xf]
  %v345 = vld [vmem:[%s4 + $0xc] sm:$0xf]
  %v346 = vld [vmem:[%s4 + $0x10] sm:$0xf]
  %v347 = vld [vmem:[%s4 + $0x14] sm:$0xf]
  %v348 = vld [vmem:[%s4 + $0x18] sm:$0xf]
  %v349 = vld [vmem:[%s4 + $0x1c] sm:$0xf]
  %v350 = vld [vmem:[%s4 + $0x20] sm:$0xf]
  %v351 = vld [vmem:[%s4 + $0x24] sm:$0xf]
  %v352 = vld [vmem:[%s4 + $0x28] sm:$0xf]
  %v353 = vld [vmem:[%s4 + $0x2c] sm:$0xf]
  %v354 = vld [vmem:[%s4 + $0x30] sm:$0xf]
  %v355 = vld [vmem:[%s4 + $0x34] sm:$0xf]
  %v356 = vld [vmem:[%s4 + $0x38] sm:$0xf]
  %v357 = vld [vmem:[%s4 + $0x3c] sm:$0xf]
  %v358 = vld [vmem:[%s5 + $0x1] sm:$0x1]
  %v359 = vperm.slane %v358, 0
  %v376 = vunpack.c.l.b16 %v342
  %v377 = vunpack.c.l.b16 %v343
  %v378 = vunpack.c.l.b16 %v344
  %v379 = vunpack.c.l.b16 %v345
  %v380 = vunpack.c.l.b16 %v346
  %v381 = vunpack.c.l.b16 %v347
  %v382 = vunpack.c.l.b16 %v348
  %v383 = vunpack.c.l.b16 %v349
  %v384 = vunpack.c.l.b16 %v350
  %v385 = vunpack.c.l.b16 %v351
  %v386 = vunpack.c.l.b16 %v352
  %v387 = vunpack.c.l.b16 %v353
  %v388 = vunpack.c.l.b16 %v354
  %v389 = vunpack.c.l.b16 %v355
  %v390 = vunpack.c.l.b16 %v356
  %v391 = vunpack.c.l.b16 %v357
  %v392 = vpack.c.b16 %v377, %v376
  %v393 = vpack.c.b16 %v379, %v378
  %v394 = vpack.c.b16 %v381, %v380
  %v395 = vpack.c.b16 %v383, %v382
  %v396 = vpack.c.b16 %v385, %v384
  %v397 = vpack.c.b16 %v387, %v386
  %v398 = vpack.c.b16 %v389, %v388
  %v399 = vpack.c.b16 %v391, %v390
  %408 = vmatpush.bf16.msra.mxu0 %v399
  %409 = vmatpush.bf16.msra.mxu0 %v398
  %410 = vmatpush.bf16.msra.mxu0 %v397
  %411 = vmatpush.bf16.msra.mxu0 %v396
  %412 = vmatpush.bf16.msra.mxu0 %v395
  %413 = vmatpush.bf16.msra.mxu0 %v394
  %414 = vmatpush.bf16.msra.mxu0 %v393
  %415 = vmatpush.bf16.msra.mxu0 %v392
  %416 = vmatmul.bf16.gmra.mxu0 %v334
  %v417 = vpop.f32.mrf.mxu0
  %v418 = vadd.f32 %v359, %v417
  %v419 = vpop.f32.mrf.mxu0
  %v420 = vadd.f32 %v359, %v419
  %421 = vmatmul.bf16.gmra.mxu0 %v335
  %v422 = vpop.f32.mrf.mxu0
  %v423 = vadd.f32 %v359, %v422
  %v424 = vpop.f32.mrf.mxu0
  %v425 = vadd.f32 %v359, %v424
  %426 = vmatmul.bf16.gmra.mxu0 %v336
  %v427 = vpop.f32.mrf.mxu0
  %v428 = vadd.f32 %v359, %v427
  %v429 = vpop.f32.mrf.mxu0
  %v430 = vadd.f32 %v359, %v429
  %431 = vmatmul.bf16.gmra.mxu0 %v337
  %v432 = vpop.f32.mrf.mxu0
  %v433 = vadd.f32 %v359, %v432
  %v434 = vpop.f32.mrf.mxu0
  %v435 = vadd.f32 %v359, %v434
  %436 = vmatmul.bf16.gmra.mxu0 %v338
  %v437 = vpop.f32.mrf.mxu0
  %v438 = vadd.f32 %v359, %v437
  %v439 = vpop.f32.mrf.mxu0
  %v440 = vadd.f32 %v359, %v439
  %441 = vmatmul.bf16.gmra.mxu0 %v339
  %v442 = vpop.f32.mrf.mxu0
  %v443 = vadd.f32 %v359, %v442
  %v444 = vpop.f32.mrf.mxu0
  %v445 = vadd.f32 %v359, %v444
  %446 = vmatmul.bf16.gmra.mxu0 %v340
  %v447 = vpop.f32.mrf.mxu0
  %v448 = vadd.f32 %v359, %v447
  %v449 = vpop.f32.mrf.mxu0
  %v450 = vadd.f32 %v359, %v449
  %451 = vmatmul.bf16.gmra.mxu0 %v341
  %v452 = vpop.f32.mrf.mxu0
  %v453 = vadd.f32 %v359, %v452
  %v454 = vpop.f32.mrf.mxu0
  %v455 = vadd.f32 %v359, %v454
  %456 = vdwg.mxu0
  %v457 = vmax.f32 %v418, 0.0
  %v458 = vmax.f32 %v420, 0.0
  %v459 = vmax.f32 %v423, 0.0
  %v460 = vmax.f32 %v425, 0.0
  %v461 = vmax.f32 %v428, 0.0
  %v462 = vmax.f32 %v430, 0.0
  %v463 = vmax.f32 %v433, 0.0
  %v464 = vmax.f32 %v435, 0.0
  %v465 = vmax.f32 %v438, 0.0
  %v466 = vmax.f32 %v440, 0.0
  %v467 = vmax.f32 %v443, 0.0
  %v468 = vmax.f32 %v445, 0.0
  %v469 = vmax.f32 %v448, 0.0
  %v470 = vmax.f32 %v450, 0.0
  %v471 = vmax.f32 %v453, 0.0
  %v472 = vmax.f32 %v455, 0.0
  %v473 = vld [vmem:[%s5 + $0x2] sm:$0x1]
  %v474 = vperm.slane %v473, 0
  %v475 = vmul.f32 %v457, %v474
  %v476 = vmul.f32 %v458, %v474
  %v477 = vmul.f32 %v459, %v474
  %v478 = vmul.f32 %v460, %v474
  %v479 = vmul.f32 %v461, %v474
  %v480 = vmul.f32 %v462, %v474
  %v481 = vmul.f32 %v463, %v474
  %v482 = vmul.f32 %v464, %v474
  %v483 = vmul.f32 %v465, %v474
  %v484 = vmul.f32 %v466, %v474
  %v485 = vmul.f32 %v467, %v474
  %v486 = vmul.f32 %v468, %v474
  %v487 = vmul.f32 %v469, %v474
  %v488 = vmul.f32 %v470, %v474
  %v489 = vmul.f32 %v471, %v474
  %v490 = vmul.f32 %v472, %v474
  %v491 = vld [vmem:[%s5 + $0x3] sm:$0x1]
  %v492 = vperm.slane %v491, 0
  %v493 = vadd.f32 %v475, %v492
  %v494 = vadd.f32 %v476, %v492
  %v495 = vadd.f32 %v477, %v492
  %v496 = vadd.f32 %v478, %v492
  %v497 = vadd.f32 %v479, %v492
  %v498 = vadd.f32 %v480, %v492
  %v499 = vadd.f32 %v481, %v492
  %v500 = vadd.f32 %v482, %v492
  %v501 = vadd.f32 %v483, %v492
  %v502 = vadd.f32 %v484, %v492
  %v503 = vadd.f32 %v485, %v492
  %v504 = vadd.f32 %v486, %v492
  %v505 = vadd.f32 %v487, %v492
  %v506 = vadd.f32 %v488, %v492
  %v507 = vadd.f32 %v489, %v492
  %v508 = vadd.f32 %v490, %v492
  %v509 = vpack.c.bf16 %v494, %v493
  %v510 = vpack.c.bf16 %v496, %v495
  %v511 = vpack.c.bf16 %v498, %v497
  %v512 = vpack.c.bf16 %v500, %v499
  %v513 = vpack.c.bf16 %v502, %v501
  %v514 = vpack.c.bf16 %v504, %v503
  %v515 = vpack.c.bf16 %v506, %v505
  %v516 = vpack.c.bf16 %v508, %v507
  %v517 = vld [vmem:[%s6] sm:$0xf]
  %v518 = vld [vmem:[%s6 + $0x4] sm:$0xf]
  %v519 = vld [vmem:[%s6 + $0x8] sm:$0xf]
  %v520 = vld [vmem:[%s6 + $0xc] sm:$0xf]
  %v521 = vld [vmem:[%s6 + $0x10] sm:$0xf]
  %v522 = vld [vmem:[%s6 + $0x14] sm:$0xf]
  %v523 = vld [vmem:[%s6 + $0x18] sm:$0xf]
  %v524 = vld [vmem:[%s6 + $0x1c] sm:$0xf]
  %v525 = vld [vmem:[%s6 + $0x20] sm:$0xf]
  %v526 = vld [vmem:[%s6 + $0x24] sm:$0xf]
  %v527 = vld [vmem:[%s6 + $0x28] sm:$0xf]
  %v528 = vld [vmem:[%s6 + $0x2c] sm:$0xf]
  %v529 = vld [vmem:[%s6 + $0x30] sm:$0xf]
  %v530 = vld [vmem:[%s6 + $0x34] sm:$0xf]
  %v531 = vld [vmem:[%s6 + $0x38] sm:$0xf]
  %v532 = vld [vmem:[%s6 + $0x3c] sm:$0xf]
  %v549 = vunpack.c.l.b16 %v517
  %v550 = vunpack.c.l.b16 %v518
  %v551 = vunpack.c.l.b16 %v519
  %v552 = vunpack.c.l.b16 %v520
  %v553 = vunpack.c.l.b16 %v521
  %v554 = vunpack.c.l.b16 %v522
  %v555 = vunpack.c.l.b16 %v523
  %v556 = vunpack.c.l.b16 %v524
  %v557 = vunpack.c.l.b16 %v525
  %v558 = vunpack.c.l.b16 %v526
  %v559 = vunpack.c.l.b16 %v527
  %v560 = vunpack.c.l.b16 %v528
  %v561 = vunpack.c.l.b16 %v529
  %v562 = vunpack.c.l.b16 %v530
  %v563 = vunpack.c.l.b16 %v531
  %v564 = vunpack.c.l.b16 %v532
  %v565 = vpack.c.b16 %v550, %v549
  %v566 = vpack.c.b16 %v552, %v551
  %v567 = vpack.c.b16 %v554, %v553
  %v568 = vpack.c.b16 %v556, %v555
  %v569 = vpack.c.b16 %v558, %v557
  %v570 = vpack.c.b16 %v560, %v559
  %v571 = vpack.c.b16 %v562, %v561
  %v572 = vpack.c.b16 %v564, %v563
  %581 = vmatpush.bf16.msra.mxu0 %v572
  %582 = vmatpush.bf16.msra.mxu0 %v571
  %583 = vmatpush.bf16.msra.mxu0 %v570
  %584 = vmatpush.bf16.msra.mxu0 %v569
  %585 = vmatpush.bf16.msra.mxu0 %v568
  %586 = vmatpush.bf16.msra.mxu0 %v567
  %587 = vmatpush.bf16.msra.mxu0 %v566
  %588 = vmatpush.bf16.msra.mxu0 %v565
  %589 = vmatmul.bf16.gmra.mxu0 %v509
  %v590 = vpop.f32.mrf.mxu0
  %v591 = vadd.f32 0.0, %v590
  %v592 = vpop.f32.mrf.mxu0
  %v593 = vadd.f32 0.0, %v592
  %594 = vmatmul.bf16.gmra.mxu0 %v510
  %v595 = vpop.f32.mrf.mxu0
  %v596 = vadd.f32 0.0, %v595
  %v597 = vpop.f32.mrf.mxu0
  %v598 = vadd.f32 0.0, %v597
  %599 = vmatmul.bf16.gmra.mxu0 %v511
  %v600 = vpop.f32.mrf.mxu0
  %v601 = vadd.f32 0.0, %v600
  %v602 = vpop.f32.mrf.mxu0
  %v603 = vadd.f32 0.0, %v602
  %604 = vmatmul.bf16.gmra.mxu0 %v512
  %v605 = vpop.f32.mrf.mxu0
  %v606 = vadd.f32 0.0, %v605
  %v607 = vpop.f32.mrf.mxu0
  %v608 = vadd.f32 0.0, %v607
  %609 = vmatmul.bf16.gmra.mxu0 %v513
  %v610 = vpop.f32.mrf.mxu0
  %v611 = vadd.f32 0.0, %v610
  %v612 = vpop.f32.mrf.mxu0
  %v613 = vadd.f32 0.0, %v612
  %614 = vmatmul.bf16.gmra.mxu0 %v514
  %v615 = vpop.f32.mrf.mxu0
  %v616 = vadd.f32 0.0, %v615
  %v617 = vpop.f32.mrf.mxu0
  %v618 = vadd.f32 0.0, %v617
  %619 = vmatmul.bf16.gmra.mxu0 %v515
  %v620 = vpop.f32.mrf.mxu0
  %v621 = vadd.f32 0.0, %v620
  %v622 = vpop.f32.mrf.mxu0
  %v623 = vadd.f32 0.0, %v622
  %624 = vmatmul.bf16.gmra.mxu0 %v516
  %v625 = vpop.f32.mrf.mxu0
  %v626 = vadd.f32 0.0, %v625
  %v627 = vpop.f32.mrf.mxu0
  %v628 = vadd.f32 0.0, %v627
  %629 = vdwg.mxu0
  %v630 = vpack.c.bf16 %v593, %v591
  %v631 = vpack.c.bf16 %v598, %v596
  %v632 = vpack.c.bf16 %v603, %v601
  %v633 = vpack.c.bf16 %v608, %v606
  %v634 = vpack.c.bf16 %v613, %v611
  %v635 = vpack.c.bf16 %v618, %v616
  %v636 = vpack.c.bf16 %v623, %v621
  %v637 = vpack.c.bf16 %v628, %v626
  %v638 = vld [vmem:[%s8] sm:$0x1]
  %v639 = vperm.slane %v638, 0
  %640 = vmatpush.bf16.msra.mxu0 %v637
  %641 = vmatpush.bf16.msra.mxu0 %v636
  %642 = vmatpush.bf16.msra.mxu0 %v635
  %643 = vmatpush.bf16.msra.mxu0 %v634
  %644 = vmatpush.bf16.msra.mxu0 %v633
  %645 = vmatpush.bf16.msra.mxu0 %v632
  %646 = vmatpush.bf16.msra.mxu0 %v631
  %647 = vmatpush.bf16.msra.mxu0 %v630
  %648 = vmatmul.bf16.gmra.mxu0 %v74
  %v649 = vpop.f32.mrf.mxu0
  %v650 = vadd.f32 %v639, %v649
  %v651 = vpop.f32.mrf.mxu0
  %v652 = vadd.f32 %v639, %v651
  %653 = vmatmul.bf16.gmra.mxu0 %v75
  %v654 = vpop.f32.mrf.mxu0
  %v655 = vadd.f32 %v639, %v654
  %v656 = vpop.f32.mrf.mxu0
  %v657 = vadd.f32 %v639, %v656
  %658 = vmatmul.bf16.gmra.mxu0 %v76
  %v659 = vpop.f32.mrf.mxu0
  %v660 = vadd.f32 %v639, %v659
  %v661 = vpop.f32.mrf.mxu0
  %v662 = vadd.f32 %v639, %v661
  %663 = vmatmul.bf16.gmra.mxu0 %v77
  %v664 = vpop.f32.mrf.mxu0
  %v665 = vadd.f32 %v639, %v664
  %v666 = vpop.f32.mrf.mxu0
  %v667 = vadd.f32 %v639, %v666
  %668 = vmatmul.bf16.gmra.mxu0 %v78
  %v669 = vpop.f32.mrf.mxu0
  %v670 = vadd.f32 %v639, %v669
  %v671 = vpop.f32.mrf.mxu0
  %v672 = vadd.f32 %v639, %v671
  %673 = vmatmul.bf16.gmra.mxu0 %v79
  %v674 = vpop.f32.mrf.mxu0
  %v675 = vadd.f32 %v639, %v674
  %v676 = vpop.f32.mrf.mxu0
  %v677 = vadd.f32 %v639, %v676
  %678 = vmatmul.bf16.gmra.mxu0 %v80
  %v679 = vpop.f32.mrf.mxu0
  %v680 = vadd.f32 %v639, %v679
  %v681 = vpop.f32.mrf.mxu0
  %v682 = vadd.f32 %v639, %v681
  %683 = vmatmul.bf16.gmra.mxu0 %v81
  %v684 = vpop.f32.mrf.mxu0
  %v685 = vadd.f32 %v639, %v684
  %v686 = vpop.f32.mrf.mxu0
  %v687 = vadd.f32 %v639, %v686
  %688 = vdwg.mxu0
  %v689 = vmax.f32 %v650, 0.0
  %v690 = vmax.f32 %v652, 0.0
  %v691 = vmax.f32 %v655, 0.0
  %v692 = vmax.f32 %v657, 0.0
  %v693 = vmax.f32 %v660, 0.0
  %v694 = vmax.f32 %v662, 0.0
  %v695 = vmax.f32 %v665, 0.0
  %v696 = vmax.f32 %v667, 0.0
  %v697 = vmax.f32 %v670, 0.0
  %v698 = vmax.f32 %v672, 0.0
  %v699 = vmax.f32 %v675, 0.0
  %v700 = vmax.f32 %v677, 0.0
  %v701 = vmax.f32 %v680, 0.0
  %v702 = vmax.f32 %v682, 0.0
  %v703 = vmax.f32 %v685, 0.0
  %v704 = vmax.f32 %v687, 0.0
  %v705 = vpack.c.bf16 %v690, %v689
  %v706 = vpack.c.bf16 %v692, %v691
  %v707 = vpack.c.bf16 %v694, %v693
  %v708 = vpack.c.bf16 %v696, %v695
  %v709 = vpack.c.bf16 %v698, %v697
  %v710 = vpack.c.bf16 %v700, %v699
  %v711 = vpack.c.bf16 %v702, %v701
  %v712 = vpack.c.bf16 %v704, %v703
  %v713 = vld [vmem:[%s7] sm:$0xf]
  %v714 = vld [vmem:[%s7 + $0x4] sm:$0xf]
  %v715 = vld [vmem:[%s7 + $0x8] sm:$0xf]
  %v716 = vld [vmem:[%s7 + $0xc] sm:$0xf]
  %v717 = vld [vmem:[%s7 + $0x10] sm:$0xf]
  %v718 = vld [vmem:[%s7 + $0x14] sm:$0xf]
  %v719 = vld [vmem:[%s7 + $0x18] sm:$0xf]
  %v720 = vld [vmem:[%s7 + $0x1c] sm:$0xf]
  %v721 = vld [vmem:[%s7 + $0x20] sm:$0xf]
  %v722 = vld [vmem:[%s7 + $0x24] sm:$0xf]
  %v723 = vld [vmem:[%s7 + $0x28] sm:$0xf]
  %v724 = vld [vmem:[%s7 + $0x2c] sm:$0xf]
  %v725 = vld [vmem:[%s7 + $0x30] sm:$0xf]
  %v726 = vld [vmem:[%s7 + $0x34] sm:$0xf]
  %v727 = vld [vmem:[%s7 + $0x38] sm:$0xf]
  %v728 = vld [vmem:[%s7 + $0x3c] sm:$0xf]
  %v729 = vld [vmem:[%s8 + $0x1] sm:$0x1]
  %v730 = vperm.slane %v729, 0
  %v747 = vunpack.c.l.b16 %v713
  %v748 = vunpack.c.l.b16 %v714
  %v749 = vunpack.c.l.b16 %v715
  %v750 = vunpack.c.l.b16 %v716
  %v751 = vunpack.c.l.b16 %v717
  %v752 = vunpack.c.l.b16 %v718
  %v753 = vunpack.c.l.b16 %v719
  %v754 = vunpack.c.l.b16 %v720
  %v755 = vunpack.c.l.b16 %v721
  %v756 = vunpack.c.l.b16 %v722
  %v757 = vunpack.c.l.b16 %v723
  %v758 = vunpack.c.l.b16 %v724
  %v759 = vunpack.c.l.b16 %v725
  %v760 = vunpack.c.l.b16 %v726
  %v761 = vunpack.c.l.b16 %v727
  %v762 = vunpack.c.l.b16 %v728
  %v763 = vpack.c.b16 %v748, %v747
  %v764 = vpack.c.b16 %v750, %v749
  %v765 = vpack.c.b16 %v752, %v751
  %v766 = vpack.c.b16 %v754, %v753
  %v767 = vpack.c.b16 %v756, %v755
  %v768 = vpack.c.b16 %v758, %v757
  %v769 = vpack.c.b16 %v760, %v759
  %v770 = vpack.c.b16 %v762, %v761
  %779 = vmatpush.bf16.msra.mxu0 %v770
  %780 = vmatpush.bf16.msra.mxu0 %v769
  %781 = vmatpush.bf16.msra.mxu0 %v768
  %782 = vmatpush.bf16.msra.mxu0 %v767
  %783 = vmatpush.bf16.msra.mxu0 %v766
  %784 = vmatpush.bf16.msra.mxu0 %v765
  %785 = vmatpush.bf16.msra.mxu0 %v764
  %786 = vmatpush.bf16.msra.mxu0 %v763
  %787 = vmatmul.bf16.gmra.mxu0 %v705
  %v788 = vpop.f32.mrf.mxu0
  %v789 = vadd.f32 %v730, %v788
  %v790 = vpop.f32.mrf.mxu0
  %v791 = vadd.f32 %v730, %v790
  %792 = vmatmul.bf16.gmra.mxu0 %v706
  %v793 = vpop.f32.mrf.mxu0
  %v794 = vadd.f32 %v730, %v793
  %v795 = vpop.f32.mrf.mxu0
  %v796 = vadd.f32 %v730, %v795
  %797 = vmatmul.bf16.gmra.mxu0 %v707
  %v798 = vpop.f32.mrf.mxu0
  %v799 = vadd.f32 %v730, %v798
  %v800 = vpop.f32.mrf.mxu0
  %v801 = vadd.f32 %v730, %v800
  %802 = vmatmul.bf16.gmra.mxu0 %v708
  %v803 = vpop.f32.mrf.mxu0
  %v804 = vadd.f32 %v730, %v803
  %v805 = vpop.f32.mrf.mxu0
  %v806 = vadd.f32 %v730, %v805
  %807 = vmatmul.bf16.gmra.mxu0 %v709
  %v808 = vpop.f32.mrf.mxu0
  %v809 = vadd.f32 %v730, %v808
  %v810 = vpop.f32.mrf.mxu0
  %v811 = vadd.f32 %v730, %v810
  %812 = vmatmul.bf16.gmra.mxu0 %v710
  %v813 = vpop.f32.mrf.mxu0
  %v814 = vadd.f32 %v730, %v813
  %v815 = vpop.f32.mrf.mxu0
  %v816 = vadd.f32 %v730, %v815
  %817 = vmatmul.bf16.gmra.mxu0 %v711
  %v818 = vpop.f32.mrf.mxu0
  %v819 = vadd.f32 %v730, %v818
  %v820 = vpop.f32.mrf.mxu0
  %v821 = vadd.f32 %v730, %v820
  %822 = vmatmul.bf16.gmra.mxu0 %v712
  %v823 = vpop.f32.mrf.mxu0
  %v824 = vadd.f32 %v730, %v823
  %v825 = vpop.f32.mrf.mxu0
  %v826 = vadd.f32 %v730, %v825
  %827 = vdwg.mxu0
  %v828 = vmax.f32 %v789, 0.0
  %v829 = vmax.f32 %v791, 0.0
  %v830 = vmax.f32 %v794, 0.0
  %v831 = vmax.f32 %v796, 0.0
  %v832 = vmax.f32 %v799, 0.0
  %v833 = vmax.f32 %v801, 0.0
  %v834 = vmax.f32 %v804, 0.0
  %v835 = vmax.f32 %v806, 0.0
  %v836 = vmax.f32 %v809, 0.0
  %v837 = vmax.f32 %v811, 0.0
  %v838 = vmax.f32 %v814, 0.0
  %v839 = vmax.f32 %v816, 0.0
  %v840 = vmax.f32 %v819, 0.0
  %v841 = vmax.f32 %v821, 0.0
  %v842 = vmax.f32 %v824, 0.0
  %v843 = vmax.f32 %v826, 0.0
  %v844 = vld [vmem:[%s8 + $0x2] sm:$0x1]
  %v845 = vperm.slane %v844, 0
  %v846 = vmul.f32 %v828, %v845
  %v847 = vmul.f32 %v829, %v845
  %v848 = vmul.f32 %v830, %v845
  %v849 = vmul.f32 %v831, %v845
  %v850 = vmul.f32 %v832, %v845
  %v851 = vmul.f32 %v833, %v845
  %v852 = vmul.f32 %v834, %v845
  %v853 = vmul.f32 %v835, %v845
  %v854 = vmul.f32 %v836, %v845
  %v855 = vmul.f32 %v837, %v845
  %v856 = vmul.f32 %v838, %v845
  %v857 = vmul.f32 %v839, %v845
  %v858 = vmul.f32 %v840, %v845
  %v859 = vmul.f32 %v841, %v845
  %v860 = vmul.f32 %v842, %v845
  %v861 = vmul.f32 %v843, %v845
  %v862 = vld [vmem:[%s8 + $0x3] sm:$0x1]
  %v863 = vperm.slane %v862, 0
  %v864 = vadd.f32 %v846, %v863
  %v865 = vadd.f32 %v847, %v863
  %v866 = vadd.f32 %v848, %v863
  %v867 = vadd.f32 %v849, %v863
  %v868 = vadd.f32 %v850, %v863
  %v869 = vadd.f32 %v851, %v863
  %v870 = vadd.f32 %v852, %v863
  %v871 = vadd.f32 %v853, %v863
  %v872 = vadd.f32 %v854, %v863
  %v873 = vadd.f32 %v855, %v863
  %v874 = vadd.f32 %v856, %v863
  %v875 = vadd.f32 %v857, %v863
  %v876 = vadd.f32 %v858, %v863
  %v877 = vadd.f32 %v859, %v863
  %v878 = vadd.f32 %v860, %v863
  %v879 = vadd.f32 %v861, %v863
  %v880 = vpack.c.bf16 %v865, %v864
  %v881 = vpack.c.bf16 %v867, %v866
  %v882 = vpack.c.bf16 %v869, %v868
  %v883 = vpack.c.bf16 %v871, %v870
  %v884 = vpack.c.bf16 %v873, %v872
  %v885 = vpack.c.bf16 %v875, %v874
  %v886 = vpack.c.bf16 %v877, %v876
  %v887 = vpack.c.bf16 %v879, %v878
  %v888 = vld [vmem:[%s2] sm:$0xf]
  %889 = vmatpush.bf16.msra.mxu0 %v887
  %890 = vmatpush.bf16.msra.mxu0 %v886
  %891 = vmatpush.bf16.msra.mxu0 %v885
  %892 = vmatpush.bf16.msra.mxu0 %v884
  %893 = vmatpush.bf16.msra.mxu0 %v883
  %894 = vmatpush.bf16.msra.mxu0 %v882
  %895 = vmatpush.bf16.msra.mxu0 %v881
  %896 = vmatpush.bf16.msra.mxu0 %v880
  %897 = vmatmul.bf16.gmra.mxu0 %v888
  %v898 = vpop.f32.mrf.mxu0
  %v899 = vadd.f32 0.0, %v898
  %v900 = vpop.f32.mrf.mxu0
  %901 = vdwg.mxu0
  %v902 = vmax.f32 %v899, 0.0
  %v903 = vpack.c.bf16 %v902, %v902
  %v904 = vld [vmem:[%s9] sm:$0xf]
  %v905 = vld [vmem:[%s9 + $0x4] sm:$0xf]
  %v906 = vld [vmem:[%s9 + $0x8] sm:$0xf]
  %v907 = vld [vmem:[%s9 + $0xc] sm:$0xf]
  %v908 = vld [vmem:[%s9 + $0x10] sm:$0xf]
  %v909 = vld [vmem:[%s9 + $0x14] sm:$0xf]
  %v910 = vld [vmem:[%s9 + $0x18] sm:$0xf]
  %v911 = vld [vmem:[%s9 + $0x1c] sm:$0xf]
  %v912 = vld [vmem:[%s9 + $0x20] sm:$0xf]
  %v913 = vld [vmem:[%s9 + $0x24] sm:$0xf]
  %v914 = vld [vmem:[%s9 + $0x28] sm:$0xf]
  %v915 = vld [vmem:[%s9 + $0x2c] sm:$0xf]
  %v916 = vld [vmem:[%s9 + $0x30] sm:$0xf]
  %v917 = vld [vmem:[%s9 + $0x34] sm:$0xf]
  %v918 = vld [vmem:[%s9 + $0x38] sm:$0xf]
  %v919 = vld [vmem:[%s9 + $0x3c] sm:$0xf]
  %v920 = vld [vmem:[%s10] sm:$0x1]
  %v922 = vperm.slane %v920, 0
  %v940 = vunpack.c.l.b16 %v904
  %v941 = vunpack.c.l.b16 %v905
  %v942 = vunpack.c.l.b16 %v906
  %v943 = vunpack.c.l.b16 %v907
  %v944 = vunpack.c.l.b16 %v908
  %v945 = vunpack.c.l.b16 %v909
  %v946 = vunpack.c.l.b16 %v910
  %v947 = vunpack.c.l.b16 %v911
  %v948 = vunpack.c.l.b16 %v912
  %v949 = vunpack.c.l.b16 %v913
  %v950 = vunpack.c.l.b16 %v914
  %v951 = vunpack.c.l.b16 %v915
  %v952 = vunpack.c.l.b16 %v916
  %v953 = vunpack.c.l.b16 %v917
  %v954 = vunpack.c.l.b16 %v918
  %v955 = vunpack.c.l.b16 %v919
  %v956 = vpack.c.b16 %v941, %v940
  %v957 = vpack.c.b16 %v943, %v942
  %v958 = vpack.c.b16 %v945, %v944
  %v959 = vpack.c.b16 %v947, %v946
  %v960 = vpack.c.b16 %v949, %v948
  %v961 = vpack.c.b16 %v951, %v950
  %v962 = vpack.c.b16 %v953, %v952
  %v963 = vpack.c.b16 %v955, %v954
  %972 = vmatpush.bf16.msra.mxu0 %v963
  %973 = vmatpush.bf16.msra.mxu0 %v962
  %974 = vmatpush.bf16.msra.mxu0 %v961
  %975 = vmatpush.bf16.msra.mxu0 %v960
  %976 = vmatpush.bf16.msra.mxu0 %v959
  %977 = vmatpush.bf16.msra.mxu0 %v958
  %978 = vmatpush.bf16.msra.mxu0 %v957
  %979 = vmatpush.bf16.msra.mxu0 %v956
  %980 = vmatmul.bf16.gmra.mxu0 %v903
  %v981 = vpop.f32.mrf.mxu0
  %v982 = vadd.f32 %v922, %v981
  %v983 = vpop.f32.mrf.mxu0
  %984 = vdwg.mxu0
  %985 = vst [vmem:[%s11] sm:$0xff] %v982
  // Predicated region
  $region46: #{gin_forward.1} parent=0 // pred_check
    _
  $region47: #{gin_forward.1} parent=0 // pred_check_branch
    %987 = sbr.rel (0) target = $region49
  $region48: #{gin_forward.1} parent=0 // pred_region
    _
  $region49: #{gin_forward.1} parent=0 // pred_fallthru
    _
  // Predicated region
  $region50: #{gin_forward.1} parent=0 // pred_check
    _
  $region51: #{gin_forward.1} parent=0 // pred_check_branch
    %989 = sbr.rel (0) target = $region53
  $region52: #{gin_forward.1} parent=0 // pred_region
    _
  $region53: #{gin_forward.1} parent=0 // pred_fallthru
    _

</llo_original>
